<compile_context>
chip_gen: v5e
topology: v5e:2x2
jax: 0.10.0
libtpu: 0.0.40
codegen_flags: <defaults>
</compile_context>

<pallas_src>
import jax
import jax.numpy as jnp
from jax.experimental import pallas as pl
from jax.experimental.pallas import tpu as pltpu


def make_channel_attention_kernel(*, hw, tile_hw, k_tiles):
    inv_hw = 1.0 / float(hw)
    # Number of valid lanes in the last HW tile (== tile_hw when it divides).
    rem = hw - (k_tiles - 1) * tile_hw

    def kernel(x_ref, w1t_ref, w2t_ref, o_ref, acc_sum, acc_max):
        # x_ref:   (TILE_N, C, TILE_HW) input tile (native dtype)
        # w1t_ref: (C, hidden)          f1 weight, pre-transposed
        # w2t_ref: (hidden, C)          f2 weight, pre-transposed
        # o_ref:   (TILE_N, C)          sigmoid channel gates
        # acc_sum / acc_max: (TILE_N, C) fp32 running reductions
        k = pl.program_id(1)
        k_last = pl.num_programs(1) - 1

        @pl.when(k == 0)
        def _init():
            acc_sum[...] = jnp.zeros_like(acc_sum)
            acc_max[...] = jnp.full_like(acc_max, -jnp.inf)

        def accumulate(x):
            # fp32 accumulation of the spatial reductions; x stays native dtype.
            acc_sum[...] = acc_sum[...] + jnp.sum(x, axis=-1, dtype=jnp.float32)
            acc_max[...] = jnp.maximum(
                acc_max[...], jnp.max(x, axis=-1).astype(jnp.float32))

        if rem == tile_hw:
            # HW tiles divide evenly: single unmasked streaming path.
            accumulate(x_ref[...])
        else:
            # Keep the steady-state loop unmasked; only the last step touches
            # the partial tile, via a static slice (no iota / where / masks).
            @pl.when(k != k_last)
            def _steady():
                accumulate(x_ref[...])

            @pl.when(k == k_last)
            def _tail():
                accumulate(x_ref[:, :, :rem])

        @pl.when(k == k_last)
        def _finalize():
            avg = acc_sum[...] * inv_hw                   # AdaptiveAvgPool2d(1)
            mx = acc_max[...]                             # AdaptiveMaxPool2d(1)
            pooled = jnp.concatenate([avg, mx], axis=0)   # (2*TILE_N, C)

            w1t = w1t_ref[...].astype(jnp.float32)        # (C, hidden)
            w2t = w2t_ref[...].astype(jnp.float32)        # (hidden, C)

            # Fused shared MLP: one matmul chain over stacked [avg; max].
            h = jnp.maximum(
                jnp.dot(pooled, w1t, preferred_element_type=jnp.float32), 0.0)
            y = jnp.dot(h, w2t, preferred_element_type=jnp.float32)

            tn = avg.shape[0]
            gate = jax.nn.sigmoid(y[:tn] + y[tn:])        # sigmoid(f2(..avg)+f2(..max))
            o_ref[...] = gate.astype(o_ref.dtype)

    return kernel


def channel_attention(x, w1, w2, *, hw_block_budget_bytes=16 << 20):
    """x: (N, C, H, W); w1: (C//r, C); w2: (C, C//r). Returns (N, C, 1, 1)."""
    N, C, H, W = x.shape
    HW = H * W
    hidden = w1.shape[0]

    x_flat = x.reshape(N, C, HW)
    w1t = jnp.transpose(w1)  # (C, hidden)
    w2t = jnp.transpose(w2)  # (hidden, C)

    # Batch tiling: the output block's sublane dim must be a multiple of 8 or
    # the full batch.  Pad awkward large batches instead of blowing up VMEM.
    if N % 8 == 0:
        tile_n, n_pad = 8, N
    elif N < 8:
        tile_n, n_pad = N, N
    else:
        n_pad = ((N + 7) // 8) * 8
        tile_n = 8
        x_flat = jnp.pad(x_flat, ((0, n_pad - N), (0, 0), (0, 0)))
    n_tiles = n_pad // tile_n
    # TODO(synk): when n_tiles == 1 the parallel grid axis has one iteration so
    # v7x's second TensorCore idles; a pooling-only kernel with a parallel
    # C-tile axis (MLP done in plain XLA) would recover it for tiny batches.

    itemsize = jnp.dtype(x.dtype).itemsize
    row_bytes = tile_n * C * itemsize

    # Lane-aligned HW tile (multiple of 128 or full HW):
    #  - budget-sized (~16 MiB default) so fewer grid steps amortize the
    #    ~0.35us/step pipeline overhead on all generations,
    #  - contiguous per-(n,c) chunk kept >= ~2 KiB even for wide-C models,
    #  - hard 24 MiB ceiling so two live buffers always fit v7x's 64 MiB VMEM.
    min_tile_hw = max(128, -(-2048 // (itemsize * 128)) * 128)
    budget_cap = (hw_block_budget_bytes // row_bytes) // 128 * 128
    hard_cap = max(128, ((24 << 20) // row_bytes) // 128 * 128)
    cap = min(max(budget_cap, min_tile_hw), hard_cap)
    tile_hw = HW if HW <= cap else int(cap)
    k_tiles = pl.cdiv(HW, tile_hw)

    kernel = make_channel_attention_kernel(hw=HW, tile_hw=tile_hw, k_tiles=k_tiles)

    # VMEM budget: double-buffered x stream + weights + output + fp32 accs + slack.
    x_block_bytes = tile_n * C * tile_hw * itemsize
    w_bytes = (C * hidden + hidden * C) * jnp.dtype(w1.dtype).itemsize
    vmem_limit = int(min(
        max(2 * x_block_bytes
            + 2 * w_bytes
            + 2 * tile_n * C * itemsize
            + 2 * tile_n * C * 4
            + (4 << 20),
            16 << 20),
        50 << 20))

    out = pl.pallas_call(
        kernel,
        out_shape=jax.ShapeDtypeStruct((n_pad, C), x.dtype),
        grid_spec=pltpu.PrefetchScalarGridSpec(
            num_scalar_prefetch=0,
            grid=(n_tiles, k_tiles),
            in_specs=[
                pl.BlockSpec((tile_n, C, tile_hw), lambda n, k: (n, 0, k)),
                pl.BlockSpec((C, hidden), lambda n, k: (0, 0)),
                pl.BlockSpec((hidden, C), lambda n, k: (0, 0)),
            ],
            out_specs=pl.BlockSpec((tile_n, C), lambda n, k: (n, 0)),
            scratch_shapes=[
                pltpu.VMEM((tile_n, C), jnp.float32),  # running sum
                pltpu.VMEM((tile_n, C), jnp.float32),  # running max
            ],
        ),
        compiler_params=pltpu.CompilerParams(
            dimension_semantics=("parallel", "arbitrary"),
            vmem_limit_bytes=vmem_limit),
    )(x_flat, w1t, w2t)

    return out[:N].reshape(N, C, 1, 1)


def reference(x, w1, w2):
    # Pure-JAX reference mirroring the PyTorch forward.
    avg = jnp.mean(x, axis=(2, 3))                    # (N, C)
    mx = jnp.max(x, axis=(2, 3))                      # (N, C)

    def mlp(v):
        h = jnp.maximum(v @ w1.T, 0.0)
        return h @ w2.T

    out = jax.nn.sigmoid(mlp(avg) + mlp(mx))
    return out.reshape(x.shape[0], x.shape[1], 1, 1)


if __name__ == "__main__":
    # Small shapes consistent with the module: in_planes=64, ratio=16 -> hidden=4.
    N, C, H, W = 2, 64, 16, 16
    ratio = 16
    hidden = C // ratio

    key = jax.random.PRNGKey(0)
    kx, k1, k2 = jax.random.split(key, 3)

    x = jax.random.normal(kx, (N, C, H, W), dtype=jnp.float32)
    # Deterministic Conv2d(1x1, bias=False) weights: shape (out, in).
    w1 = jax.random.normal(k1, (hidden, C), dtype=jnp.float32) * (2.0 / C) ** 0.5
    w2 = jax.random.normal(k2, (C, hidden), dtype=jnp.float32) * (2.0 / hidden) ** 0.5

    out = jax.block_until_ready(channel_attention(x, w1, w2))
    ref = reference(x, w1, w2)
    assert out.shape == (N, C, 1, 1), out.shape
    assert jnp.allclose(out, ref, atol=1e-5, rtol=1e-5), float(jnp.max(jnp.abs(out - ref)))

    # Also exercise the multi-step streaming path with a partial last HW tile
    # (force a small block budget so HW=576 splits into 512 + 64 lanes).
    x2 = jax.random.normal(jax.random.PRNGKey(1), (2, C, 24, 24), dtype=jnp.float32)
    out2 = jax.block_until_ready(
        channel_attention(x2, w1, w2, hw_block_budget_bytes=1))
    ref2 = reference(x2, w1, w2)
    assert jnp.allclose(out2, ref2, atol=1e-5, rtol=1e-5), float(jnp.max(jnp.abs(out2 - ref2)))

    print("KERNEL_OK")
</pallas_src>

<mosaic_0001>
module attributes {stable_mosaic.version = 11 : i64} {
  func.func @kernel(%arg0: i32, %arg1: i32, %arg2: memref<2x64x256xf32, #tpu.memory_space<vmem>>, %arg3: memref<64x4xf32, #tpu.memory_space<vmem>>, %arg4: memref<4x64xf32, #tpu.memory_space<vmem>>, %arg5: memref<2x64xf32, #tpu.memory_space<vmem>>, %arg6: memref<2x64xf32, #tpu.memory_space<vmem>>, %arg7: memref<2x64xf32, #tpu.memory_space<vmem>>) attributes {dimension_semantics = [#tpu.dimension_semantics<parallel>, #tpu.dimension_semantics<arbitrary>], iteration_bounds = array<i64: 1, 1>, scalar_prefetch = 0 : i64, scratch_operands = 2 : i64, tpu.core_type = #tpu.core_type<tc>, window_params = [{transform_indices = @transform_0, window_bounds = array<i64: 2, 64, 256>}, {pipeline_mode = #tpu.pipeline_mode<synchronous>, transform_indices = @transform_1, window_bounds = array<i64: 64, 4>}, {pipeline_mode = #tpu.pipeline_mode<synchronous>, transform_indices = @transform_2, window_bounds = array<i64: 4, 64>}, {transform_indices = @transform_3, window_bounds = array<i64: 2, 64>}]} {
    %c0_i32 = arith.constant 0 : i32
    %0 = arith.cmpi eq, %arg1, %c0_i32 : i32
    %1 = arith.extui %0 : i1 to i32
    %c0_i32_0 = arith.constant 0 : i32
    %2 = arith.cmpi ne, %1, %c0_i32_0 : i32
    scf.if %2 {
      %cst_14 = arith.constant 0.000000e+00 : f32
      %15 = vector.broadcast %cst_14 : f32 to vector<2x64xf32>
      %c0_15 = arith.constant 0 : index
      %c0_16 = arith.constant 0 : index
      %16 = vector.load %arg6[%c0_15, %c0_16] : memref<2x64xf32, #tpu.memory_space<vmem>>, vector<2x64xf32>
      tpu.vector_store %arg6[%c0_15, %c0_16], %15 {strides = array<i32>} : memref<2x64xf32, #tpu.memory_space<vmem>>, vector<2x64xf32>,
      %cst_17 = arith.constant 0xFF800000 : f32
      %17 = vector.broadcast %cst_17 : f32 to vector<2x64xf32>
      %c0_18 = arith.constant 0 : index
      %c0_19 = arith.constant 0 : index
      %18 = vector.load %arg7[%c0_18, %c0_19] : memref<2x64xf32, #tpu.memory_space<vmem>>, vector<2x64xf32>
      tpu.vector_store %arg7[%c0_18, %c0_19], %17 {strides = array<i32>} : memref<2x64xf32, #tpu.memory_space<vmem>>, vector<2x64xf32>,
    } else {
    }
    %c0 = arith.constant 0 : index
    %c0_1 = arith.constant 0 : index
    %c0_2 = arith.constant 0 : index
    %3 = vector.load %arg2[%c0, %c0_1, %c0_2] : memref<2x64x256xf32, #tpu.memory_space<vmem>>, vector<2x64x256xf32>
    %c0_3 = arith.constant 0 : index
    %c0_4 = arith.constant 0 : index
    %4 = vector.load %arg6[%c0_3, %c0_4] : memref<2x64xf32, #tpu.memory_space<vmem>>, vector<2x64xf32>
    %cst = arith.constant dense<0.000000e+00> : vector<2x64xf32>
    %5 = vector.multi_reduction <add>, %3, %cst [2] : vector<2x64x256xf32> to vector<2x64xf32>
    %6 = arith.addf %4, %5 : vector<2x64xf32>
    %c0_5 = arith.constant 0 : index
    %c0_6 = arith.constant 0 : index
    %7 = vector.load %arg6[%c0_5, %c0_6] : memref<2x64xf32, #tpu.memory_space<vmem>>, vector<2x64xf32>
    tpu.vector_store %arg6[%c0_5, %c0_6], %6 {strides = array<i32>} : memref<2x64xf32, #tpu.memory_space<vmem>>, vector<2x64xf32>,
    %c0_7 = arith.constant 0 : index
    %c0_8 = arith.constant 0 : index
    %8 = vector.load %arg7[%c0_7, %c0_8] : memref<2x64xf32, #tpu.memory_space<vmem>>, vector<2x64xf32>
    %cst_9 = arith.constant dense<0xFF800000> : vector<2x64xf32>
    %9 = vector.multi_reduction <maximumf>, %3, %cst_9 [2] : vector<2x64x256xf32> to vector<2x64xf32>
    %10 = arith.maximumf %8, %9 : vector<2x64xf32>
    %c0_10 = arith.constant 0 : index
    %c0_11 = arith.constant 0 : index
    %11 = vector.load %arg7[%c0_10, %c0_11] : memref<2x64xf32, #tpu.memory_space<vmem>>, vector<2x64xf32>
    tpu.vector_store %arg7[%c0_10, %c0_11], %10 {strides = array<i32>} : memref<2x64xf32, #tpu.memory_space<vmem>>, vector<2x64xf32>,
    %c0_i32_12 = arith.constant 0 : i32
    %12 = arith.cmpi eq, %arg1, %c0_i32_12 : i32
    %13 = arith.extui %12 : i1 to i32
    %c0_i32_13 = arith.constant 0 : i32
    %14 = arith.cmpi ne, %13, %c0_i32_13 : i32
    scf.if %14 {
      %c0_14 = arith.constant 0 : index
      %c0_15 = arith.constant 0 : index
      %15 = vector.load %arg6[%c0_14, %c0_15] : memref<2x64xf32, #tpu.memory_space<vmem>>, vector<2x64xf32>
      %cst_16 = arith.constant 3.906250e-03 : f32
      %16 = vector.broadcast %cst_16 : f32 to vector<2x64xf32>
      %17 = arith.mulf %15, %16 : vector<2x64xf32>
      %c0_17 = arith.constant 0 : index
      %c0_18 = arith.constant 0 : index
      %18 = vector.load %arg7[%c0_17, %c0_18] : memref<2x64xf32, #tpu.memory_space<vmem>>, vector<2x64xf32>
      %19 = tpu.concatenate %17, %18 in 0 : vector<2x64xf32>, vector<2x64xf32> -> vector<4x64xf32>
      %c0_19 = arith.constant 0 : index
      %c0_20 = arith.constant 0 : index
      %20 = vector.load %arg3[%c0_19, %c0_20] : memref<64x4xf32, #tpu.memory_space<vmem>>, vector<64x4xf32>
      %c0_21 = arith.constant 0 : index
      %c0_22 = arith.constant 0 : index
      %21 = vector.load %arg4[%c0_21, %c0_22] : memref<4x64xf32, #tpu.memory_space<vmem>>, vector<4x64xf32>
      %cst_23 = arith.constant dense<0.000000e+00> : vector<4x4xf32>
      %22 = tpu.matmul %19, %20, %cst_23 {dimension_numbers = #tpu.dot_dimension_numbers<[1], [0], [0], [1], [0, 0, 1, 1], [], []>} : vector<4x64xf32>, vector<64x4xf32>, vector<4x4xf32> -> vector<4x4xf32>
      %cst_24 = arith.constant 0.000000e+00 : f32
      %23 = vector.broadcast %cst_24 : f32 to vector<4x4xf32>
      %24 = arith.maximumf %22, %23 : vector<4x4xf32>
      %cst_25 = arith.constant dense<0.000000e+00> : vector<4x64xf32>
      %25 = tpu.matmul %24, %21, %cst_25 {dimension_numbers = #tpu.dot_dimension_numbers<[1], [0], [0], [1], [0, 0, 1, 1], [], []>} : vector<4x4xf32>, vector<4x64xf32>, vector<4x64xf32> -> vector<4x64xf32>
      %26 = vector.extract_strided_slice %25 {offsets = [0, 0], sizes = [2, 64], strides = [1, 1]} : vector<4x64xf32> to vector<2x64xf32>
      %27 = vector.extract_strided_slice %25 {offsets = [2, 0], sizes = [2, 64], strides = [1, 1]} : vector<4x64xf32> to vector<2x64xf32>
      %28 = arith.addf %26, %27 : vector<2x64xf32>
      %29 = arith.negf %28 : vector<2x64xf32>
      %30 = math.exp %29 : vector<2x64xf32>
      %cst_26 = arith.constant 1.000000e+00 : f32
      %31 = vector.broadcast %cst_26 : f32 to vector<2x64xf32>
      %32 = arith.addf %31, %30 : vector<2x64xf32>
      %33 = arith.divf %31, %32 : vector<2x64xf32>
      %c0_27 = arith.constant 0 : index
      %c0_28 = arith.constant 0 : index
      %34 = vector.load %arg5[%c0_27, %c0_28] : memref<2x64xf32, #tpu.memory_space<vmem>>, vector<2x64xf32>
      tpu.vector_store %arg5[%c0_27, %c0_28], %33 {strides = array<i32>} : memref<2x64xf32, #tpu.memory_space<vmem>>, vector<2x64xf32>,
    } else {
    }
    return
  }
  func.func @transform_0(%arg0: i32, %arg1: i32) -> (i32, i32, i32) {
    %c0_i32 = arith.constant 0 : i32
    %c0_i32_0 = arith.constant 0 : i32
    return %arg0, %c0_i32, %arg1 : i32, i32, i32
  }
  func.func @transform_1(%arg0: i32, %arg1: i32) -> (i32, i32) {
    %c0_i32 = arith.constant 0 : i32
    %c0_i32_0 = arith.constant 0 : i32
    %c0_i32_1 = arith.constant 0 : i32
    return %c0_i32, %c0_i32_0 : i32, i32
  }
  func.func @transform_2(%arg0: i32, %arg1: i32) -> (i32, i32) {
    %c0_i32 = arith.constant 0 : i32
    %c0_i32_0 = arith.constant 0 : i32
    %c0_i32_1 = arith.constant 0 : i32
    return %c0_i32, %c0_i32_0 : i32, i32
  }
  func.func @transform_3(%arg0: i32, %arg1: i32) -> (i32, i32) {
    %c0_i32 = arith.constant 0 : i32
    %c0_i32_0 = arith.constant 0 : i32
    return %arg0, %c0_i32 : i32, i32
  }
}

</mosaic_0001>

<llo_original>
// kernel: tpu_custom_call.1
$region0: #{tpu_custom_call.1}
  #allocation0 [shape = 'u32[]', space=smem, size = 0x4, offset = 0x4, fixed_abs, tag = 'smem constant byte address 0x4 - core index']
  #allocation1 [shape = 'u32[72,128]{1,0:T(1,128)}', space=vmem, size = 0x9000, scoped, tag = 'internal scratch']
  #allocation2 [shape = 'f32[2,64]{1,0:T(2,128)}', space=vmem, size = 0x400, scoped, tag = 'scratch operand']
  #allocation3 [shape = 'f32[2,64]{1,0:T(2,128)}', space=vmem, size = 0x400, scoped, tag = 'scratch operand']
  %s0 = inlined_call_operand.hbm [shape: f32[2,64,256], index: 0, kind: input, shape index: {}]
  %s1 = inlined_call_operand.vmem [shape: f32[64,4], index: 1, kind: input, shape index: {}]
  %s2 = inlined_call_operand.vmem [shape: f32[4,64], index: 2, kind: input, shape index: {}]
  %s3 = inlined_call_operand.hbm [shape: f32[2,64], index: 3, kind: output, shape index: {}]
  %s4 = sld [smem:[#allocation0]]
  $region34: #{tpu_custom_call.1} parent=0
    _
  %s6 = ssub.s32 1, %s4
  %s7 = scalar_select 0, %s6, %s4
  $region1: #{tpu_custom_call.1} parent=0
    #allocation4 [shape = 'u8[131072]{0}', space=vmem, size = 0x20000, scoped, tag = 'input window, operand 0, single buffered']
    #allocation5 [shape = 's32[1]{0}', space=sflag, size = 0x4, scoped, tag = 'scoped memory for tpu_custom_call.1']
    #allocation6 [shape = 's32[1]{0}', space=sflag, size = 0x4, scoped, tag = 'scoped memory for tpu_custom_call.1']
    #allocation7 [shape = 'u8[1024]{0}', space=vmem, size = 0x400, scoped, tag = 'output window, operand 0, single buffered']
    %8 = vsyncpa [#allocation5], 0
    %9 = vsyncpa [#allocation6], 0
    // Predicated region
    $region2: #{tpu_custom_call.1} parent=1 // pred_check
      _
    $region3: #{tpu_custom_call.1} parent=1 // pred_check_branch
      %11 = sbr.rel (0) target = $region5
    $region4: #{tpu_custom_call.1} parent=1 // pred_region
      %13 = vsyncadd [#allocation5], 0
      %s14 = sshll.u32 %s0, 4
      %s15 = int_to_ptr.hbm [resolvable:$true] %s14
      %s16 = sshll.u32 [#allocation4], 4
      %s17 = int_to_ptr.vmem [resolvable:$true] %s16
      %22 = dma.hbm_to_vmem [thread:$0]  %s15, 4096, %s17, [#allocation5], 256, 256, 16
    $region5: #{tpu_custom_call.1} parent=1 // pred_fallthru
      _
    // Predicated region
    $region6: #{tpu_custom_call.1} parent=1 // pred_check
      _
    $region7: #{tpu_custom_call.1} parent=1 // pred_check_branch
      %24 = sbr.rel (0) target = $region9
    $region8: #{tpu_custom_call.1} parent=1 // pred_region
      _
    $region9: #{tpu_custom_call.1} parent=1 // pred_fallthru
      _
    // Predicated region
    $region10: #{tpu_custom_call.1} parent=1 // pred_check
      _
    $region11: #{tpu_custom_call.1} parent=1 // pred_check_branch
      %26 = sbr.rel (0) target = $region13
    $region12: #{tpu_custom_call.1} parent=1 // pred_region
      _
    $region13: #{tpu_custom_call.1} parent=1 // pred_fallthru
      _
    // Predicated region
    $region14: #{tpu_custom_call.1} parent=1 // pred_check
      _
    $region15: #{tpu_custom_call.1} parent=1 // pred_check_branch
      %28 = sbr.rel (0) target = $region17
    $region16: #{tpu_custom_call.1} parent=1 // pred_region
      %30 = dma.done [#allocation5], 4096
    $region17: #{tpu_custom_call.1} parent=1 // pred_fallthru
      _
    %p31 = scmp.eq.s32.totalorder 0, 0
    // Predicated region
    $region18: #{tpu_custom_call.1} parent=1 // pred_check
      %p32 = pneg %p31
    $region19: #{tpu_custom_call.1} parent=1 // pred_check_branch
      %34 = sbr.rel (%p32) target = $region21
    $region20: #{tpu_custom_call.1} parent=1 // pred_region
      %vm35 = vcmask 517120
      %36 = vst.msk [vmem:[#allocation2] sm:$0x3] %vm35, 0.0
      %37 = vst.msk [vmem:[#allocation3] sm:$0x3] %vm35, -inf
    $region21: #{tpu_custom_call.1} parent=1 // pred_fallthru
      _
    %v38 = vld [vmem:[#allocation4] sm:$0xff]
    %v39 = vld [vmem:[#allocation4 + $0x8] sm:$0xff]
    %v40 = vld [vmem:[#allocation4 + $0x10] sm:$0xff]
    %v41 = vld [vmem:[#allocation4 + $0x18] sm:$0xff]
    %v42 = vld [vmem:[#allocation4 + $0x20] sm:$0xff]
    %v43 = vld [vmem:[#allocation4 + $0x28] sm:$0xff]
    %v44 = vld [vmem:[#allocation4 + $0x30] sm:$0xff]
    %v45 = vld [vmem:[#allocation4 + $0x38] sm:$0xff]
    %v46 = vld [vmem:[#allocation4 + $0x40] sm:$0xff]
    %v47 = vld [vmem:[#allocation4 + $0x48] sm:$0xff]
    %v48 = vld [vmem:[#allocation4 + $0x50] sm:$0xff]
    %v49 = vld [vmem:[#allocation4 + $0x58] sm:$0xff]
    %v50 = vld [vmem:[#allocation4 + $0x60] sm:$0xff]
    %v51 = vld [vmem:[#allocation4 + $0x68] sm:$0xff]
    %v52 = vld [vmem:[#allocation4 + $0x70] sm:$0xff]
    %v53 = vld [vmem:[#allocation4 + $0x78] sm:$0xff]
    %v54 = vld [vmem:[#allocation4 + $0x80] sm:$0xff]
    %v55 = vld [vmem:[#allocation4 + $0x88] sm:$0xff]
    %v56 = vld [vmem:[#allocation4 + $0x90] sm:$0xff]
    %v57 = vld [vmem:[#allocation4 + $0x98] sm:$0xff]
    %v58 = vld [vmem:[#allocation4 + $0xa0] sm:$0xff]
    %v59 = vld [vmem:[#allocation4 + $0xa8] sm:$0xff]
    %v60 = vld [vmem:[#allocation4 + $0xb0] sm:$0xff]
    %v61 = vld [vmem:[#allocation4 + $0xb8] sm:$0xff]
    %v62 = vld [vmem:[#allocation4 + $0xc0] sm:$0xff]
    %v63 = vld [vmem:[#allocation4 + $0xc8] sm:$0xff]
    %v64 = vld [vmem:[#allocation4 + $0xd0] sm:$0xff]
    %v65 = vld [vmem:[#allocation4 + $0xd8] sm:$0xff]
    %v66 = vld [vmem:[#allocation4 + $0xe0] sm:$0xff]
    %v67 = vld [vmem:[#allocation4 + $0xe8] sm:$0xff]
    %v68 = vld [vmem:[#allocation4 + $0xf0] sm:$0xff]
    %v69 = vld [vmem:[#allocation4 + $0xf8] sm:$0xff]
    %v70 = vld [vmem:[#allocation2] sm:$0x3]
    %v71 = vadd.f32 %v38, %v39
    %72 = vadd.xlane.f32.xlu0 %v71
    %v73 = vpop.xlane.xlu0 %72
    %v74 = vadd.f32 %v40, %v41
    %75 = vadd.xlane.f32.xlu0 %v74
    %v76 = vpop.xlane.xlu0 %75
    %v77 = vadd.f32 %v42, %v43
    %78 = vadd.xlane.f32.xlu0 %v77
    %v79 = vpop.xlane.xlu0 %78
    %v80 = vadd.f32 %v44, %v45
    %81 = vadd.xlane.f32.xlu0 %v80
    %v82 = vpop.xlane.xlu0 %81
    %v83 = vadd.f32 %v46, %v47
    %84 = vadd.xlane.f32.xlu0 %v83
    %v85 = vpop.xlane.xlu0 %84
    %v86 = vadd.f32 %v48, %v49
    %87 = vadd.xlane.f32.xlu0 %v86
    %v88 = vpop.xlane.xlu0 %87
    %v89 = vadd.f32 %v50, %v51
    %90 = vadd.xlane.f32.xlu0 %v89
    %v91 = vpop.xlane.xlu0 %90
    %v92 = vadd.f32 %v52, %v53
    %93 = vadd.xlane.f32.xlu0 %v92
    %v94 = vpop.xlane.xlu0 %93
    %v95 = vadd.f32 %v54, %v55
    %96 = vadd.xlane.f32.xlu0 %v95
    %v97 = vpop.xlane.xlu0 %96
    %v98 = vadd.f32 %v56, %v57
    %99 = vadd.xlane.f32.xlu0 %v98
    %v100 = vpop.xlane.xlu0 %99
    %v101 = vadd.f32 %v58, %v59
    %102 = vadd.xlane.f32.xlu0 %v101
    %v103 = vpop.xlane.xlu0 %102
    %v104 = vadd.f32 %v60, %v61
    %105 = vadd.xlane.f32.xlu0 %v104
    %v106 = vpop.xlane.xlu0 %105
    %v107 = vadd.f32 %v62, %v63
    %108 = vadd.xlane.f32.xlu0 %v107
    %v109 = vpop.xlane.xlu0 %108
    %v110 = vadd.f32 %v64, %v65
    %111 = vadd.xlane.f32.xlu0 %v110
    %v112 = vpop.xlane.xlu0 %111
    %v113 = vadd.f32 %v66, %v67
    %114 = vadd.xlane.f32.xlu0 %v113
    %v115 = vpop.xlane.xlu0 %114
    %v116 = vadd.f32 %v68, %v69
    %117 = vadd.xlane.f32.xlu0 %v116
    %v118 = vpop.xlane.xlu0 %117
    %v135 = vlaneseq
    %v136 = vand.u32 %v135, 127
    %v137 = vperm.slane %v73, %v136
    %v138 = vadd.s32 %v136, 4294967288
    %v139 = vperm.slane %v76, %v138
    %vm140 = vcmask 130112
    %v141 = vsel %vm140, %v139, %v137
    %v142 = vadd.s32 %v136, 4294967280
    %v143 = vperm.slane %v79, %v142
    %vm144 = vcmask 195712
    %v145 = vsel %vm144, %v143, %v141
    %v146 = vadd.s32 %v136, 4294967272
    %v147 = vperm.slane %v82, %v146
    %vm148 = vcmask 261312
    %v149 = vsel %vm148, %v147, %v145
    %v150 = vadd.s32 %v136, 4294967264
    %v151 = vperm.slane %v85, %v150
    %vm152 = vcmask 326912
    %v153 = vsel %vm152, %v151, %v149
    %v154 = vadd.s32 %v136, 4294967256
    %v155 = vperm.slane %v88, %v154
    %vm156 = vcmask 392512
    %v157 = vsel %vm156, %v155, %v153
    %v158 = vadd.s32 %v136, 4294967248
    %v159 = vperm.slane %v91, %v158
    %vm160 = vcmask 458112
    %v161 = vsel %vm160, %v159, %v157
    %v162 = vadd.s32 %v136, 4294967240
    %v163 = vperm.slane %v94, %v162
    %vm164 = vcmask 523712
    %v165 = vsel %vm164, %v163, %v161
    %v166 = vperm.slane %v97, %v136
    %v167 = vperm.slane %v100, %v138
    %v168 = vsel %vm140, %v167, %v166
    %v169 = vperm.slane %v103, %v142
    %v170 = vsel %vm144, %v169, %v168
    %v171 = vperm.slane %v106, %v146
    %v172 = vsel %vm148, %v171, %v170
    %v173 = vperm.slane %v109, %v150
    %v174 = vsel %vm152, %v173, %v172
    %v175 = vperm.slane %v112, %v154
    %v176 = vsel %vm156, %v175, %v174
    %v177 = vperm.slane %v115, %v158
    %v178 = vsel %vm160, %v177, %v176
    %v179 = vperm.slane %v118, %v162
    %v180 = vsel %vm164, %v179, %v178
    %vm181 = vcmask 1041409
    %v182 = vsel %vm181, %v180, %v165
    %v184 = vadd.f32 %v70, %v182
    %vm185 = vcmask 517120
    %186 = vst.msk [vmem:[#allocation2] sm:$0x3] %vm185, %v184
    %v187 = vld [vmem:[#allocation3] sm:$0x3]
    %v188 = vmax.f32 %v38, %v39
    %189 = vmax.xlane.f32.xlu0 %v188
    %v190 = vpop.xlane.xlu0 %189
    %v191 = vmax.f32 %v40, %v41
    %192 = vmax.xlane.f32.xlu0 %v191
    %v193 = vpop.xlane.xlu0 %192
    %v194 = vmax.f32 %v42, %v43
    %195 = vmax.xlane.f32.xlu0 %v194
    %v196 = vpop.xlane.xlu0 %195
    %v197 = vmax.f32 %v44, %v45
    %198 = vmax.xlane.f32.xlu0 %v197
    %v199 = vpop.xlane.xlu0 %198
    %v200 = vmax.f32 %v46, %v47
    %201 = vmax.xlane.f32.xlu0 %v200
    %v202 = vpop.xlane.xlu0 %201
    %v203 = vmax.f32 %v48, %v49
    %204 = vmax.xlane.f32.xlu0 %v203
    %v205 = vpop.xlane.xlu0 %204
    %v206 = vmax.f32 %v50, %v51
    %207 = vmax.xlane.f32.xlu0 %v206
    %v208 = vpop.xlane.xlu0 %207
    %v209 = vmax.f32 %v52, %v53
    %210 = vmax.xlane.f32.xlu0 %v209
    %v211 = vpop.xlane.xlu0 %210
    %v212 = vmax.f32 %v54, %v55
    %213 = vmax.xlane.f32.xlu0 %v212
    %v214 = vpop.xlane.xlu0 %213
    %v215 = vmax.f32 %v56, %v57
    %216 = vmax.xlane.f32.xlu0 %v215
    %v217 = vpop.xlane.xlu0 %216
    %v218 = vmax.f32 %v58, %v59
    %219 = vmax.xlane.f32.xlu0 %v218
    %v220 = vpop.xlane.xlu0 %219
    %v221 = vmax.f32 %v60, %v61
    %222 = vmax.xlane.f32.xlu0 %v221
    %v223 = vpop.xlane.xlu0 %222
    %v224 = vmax.f32 %v62, %v63
    %225 = vmax.xlane.f32.xlu0 %v224
    %v226 = vpop.xlane.xlu0 %225
    %v227 = vmax.f32 %v64, %v65
    %228 = vmax.xlane.f32.xlu0 %v227
    %v229 = vpop.xlane.xlu0 %228
    %v230 = vmax.f32 %v66, %v67
    %231 = vmax.xlane.f32.xlu0 %v230
    %v232 = vpop.xlane.xlu0 %231
    %v233 = vmax.f32 %v68, %v69
    %234 = vmax.xlane.f32.xlu0 %v233
    %v235 = vpop.xlane.xlu0 %234
    %v252 = vperm.slane %v190, %v136
    %v253 = vperm.slane %v193, %v138
    %v254 = vsel %vm140, %v253, %v252
    %v255 = vperm.slane %v196, %v142
    %v256 = vsel %vm144, %v255, %v254
    %v257 = vperm.slane %v199, %v146
    %v258 = vsel %vm148, %v257, %v256
    %v259 = vperm.slane %v202, %v150
    %v260 = vsel %vm152, %v259, %v258
    %v261 = vperm.slane %v205, %v154
    %v262 = vsel %vm156, %v261, %v260
    %v263 = vperm.slane %v208, %v158
    %v264 = vsel %vm160, %v263, %v262
    %v265 = vperm.slane %v211, %v162
    %v266 = vsel %vm164, %v265, %v264
    %v267 = vperm.slane %v214, %v136
    %v268 = vperm.slane %v217, %v138
    %v269 = vsel %vm140, %v268, %v267
    %v270 = vperm.slane %v220, %v142
    %v271 = vsel %vm144, %v270, %v269
    %v272 = vperm.slane %v223, %v146
    %v273 = vsel %vm148, %v272, %v271
    %v274 = vperm.slane %v226, %v150
    %v275 = vsel %vm152, %v274, %v273
    %v276 = vperm.slane %v229, %v154
    %v277 = vsel %vm156, %v276, %v275
    %v278 = vperm.slane %v232, %v158
    %v279 = vsel %vm160, %v278, %v277
    %v280 = vperm.slane %v235, %v162
    %v281 = vsel %vm164, %v280, %v279
    %v282 = vsel %vm181, %v281, %v266
    %v284 = vmax.f32 %v187, %v282
    %285 = vst.msk [vmem:[#allocation3] sm:$0x3] %vm185, %v284
    // Predicated region
    $region22: #{tpu_custom_call.1} parent=1 // pred_check
      %p286 = pneg %p31
    $region23: #{tpu_custom_call.1} parent=1 // pred_check_branch
      %288 = sbr.rel (%p286) target = $region25
    $region24: #{tpu_custom_call.1} parent=1 // pred_region
      %v289 = vld [vmem:[#allocation2] sm:$0x3]
      %v290 = vmul.f32 %v289, 0.00390625
      %v291 = vld [vmem:[#allocation3] sm:$0x3]
      %v293 = vrot.slane %v291, 6
      %vm295 = vcmask 1041408
      %v296 = vsel %vm295, %v290, %v293
      %v297 = vld [vmem:[%s1] sm:$0xff]
      %v298 = vld [vmem:[%s1 + $0x8] sm:$0xff]
      %v299 = vld [vmem:[%s1 + $0x10] sm:$0xff]
      %v300 = vld [vmem:[%s1 + $0x18] sm:$0xff]
      %v301 = vld [vmem:[%s1 + $0x20] sm:$0xff]
      %v302 = vld [vmem:[%s1 + $0x28] sm:$0xff]
      %v303 = vld [vmem:[%s1 + $0x30] sm:$0xff]
      %v304 = vld [vmem:[%s1 + $0x38] sm:$0xff]
      %v305 = vld [vmem:[%s2] sm:$0xf]
      %vm306 = vcmask 523264
      %v308 = vsel %vm306, %v296, 0
      %310 = vmatpush.msra.mxu0 0.0
      %311 = vmatpush.msra.mxu0 0.0
      %312 = vmatpush.msra.mxu0 0.0
      %313 = vmatpush.msra.mxu0 0.0
      %314 = vmatpush.msra.mxu0 0.0
      %315 = vmatpush.msra.mxu0 0.0
      %316 = vmatpush.msra.mxu0 0.0
      %317 = vmatpush.msra.mxu0 0.0
      %318 = vmatpush.msra.mxu0 %v304
      %319 = vmatpush.msra.mxu0 %v303
      %320 = vmatpush.msra.mxu0 %v302
      %321 = vmatpush.msra.mxu0 %v301
      %322 = vmatpush.msra.mxu0 %v300
      %323 = vmatpush.msra.mxu0 %v299
      %324 = vmatpush.msra.mxu0 %v298
      %325 = vmatpush.msra.mxu0 %v297
      %326 = vmatmul.f32.gmra.mxu0 %v308
      %v327 = vpop.f32.mrf.mxu0
      %v328 = vadd.f32 0.0, %v327
      %329 = vdwg.mxu0
      %v330 = vmax.f32 %v328, 0.0
      %vm331 = vcmask 31744
      %v333 = vsel %vm331, %v330, 0
      %vm335 = vcmask 1043456
      %v337 = vsel %vm335, %v305, 0
      %339 = vmatpush.msra.mxu0 0.0
      %340 = vmatpush.msra.mxu0 0.0
      %341 = vmatpush.msra.mxu0 0.0
      %342 = vmatpush.msra.mxu0 0.0
      %343 = vmatpush.msra.mxu0 0.0
      %344 = vmatpush.msra.mxu0 0.0
      %345 = vmatpush.msra.mxu0 0.0
      %346 = vmatpush.msra.mxu0 0.0
      %347 = vmatpush.msra.mxu0 0.0
      %348 = vmatpush.msra.mxu0 0.0
      %349 = vmatpush.msra.mxu0 0.0
      %350 = vmatpush.msra.mxu0 0.0
      %351 = vmatpush.msra.mxu0 0.0
      %352 = vmatpush.msra.mxu0 0.0
      %353 = vmatpush.msra.mxu0 0.0
      %354 = vmatpush.msra.mxu0 %v337
      %355 = vmatmul.f32.gmra.mxu0 %v333
      %v356 = vpop.f32.mrf.mxu0
      %v357 = vadd.f32 0.0, %v356
      %358 = vdwg.mxu0
      %v360 = vrot.slane %v357, 2
      %v362 = vadd.f32 %v357, %v360
      %v363 = vxor.u32 %v362, 2147483648
      %v364 = vmul.f32 %v363, 1.442695
      %v365 = vpow.pop %v364
      %v366 = vadd.f32 %v365, 1.0
      %v367 = vrcp.pop %v366
      %v368 = vmul.f32 %v366, %v367
      %v369 = vsub.f32 1.0, %v368
      %v370 = vmul.f32 %v367, %v369
      %v371 = vadd.f32 %v367, %v370
      %vm372 = vweird.f32 %v366
      %vm373 = vweird.f32 %v367
      %vm374 = vmor %vm372, %vm373
      %v375 = vsel %vm374, %v367, %v371
      %v376 = vand.u32 2147483647, %v366
      %vm377 = vcmp.eq.f32.partialorder %v376, 8.507059e+37
      %v378 = vand.u32 %v366, 2147483648
      %v379 = vor.u32 1.1754944e-38, %v378
      %v380 = vsel %vm377, %v379, %v375
      %v381 = vmul.f32 1.0, %v380
      %382 = vst.msk [vmem:[#allocation7] sm:$0x3] %vm185, %v381
    $region25: #{tpu_custom_call.1} parent=1 // pred_fallthru
      _
    // Predicated region
    $region26: #{tpu_custom_call.1} parent=1 // pred_check
      _
    $region27: #{tpu_custom_call.1} parent=1 // pred_check_branch
      %384 = sbr.rel (0) target = $region29
    $region28: #{tpu_custom_call.1} parent=1 // pred_region
      %386 = vsyncadd [#allocation6], 0
      %s388 = sshll.u32 [#allocation7], 4
      %s389 = int_to_ptr.vmem [resolvable:$true] %s388
      %s390 = sshll.u32 %s3, 4
      %s391 = int_to_ptr.hbm [resolvable:$true] %s390
      %393 = dma.vmem_to_hbm [thread:$0]  %s389, 32, %s391, [#allocation6]
    $region29: #{tpu_custom_call.1} parent=1 // pred_fallthru
      _
    // Predicated region
    $region30: #{tpu_custom_call.1} parent=1 // pred_check
      _
    $region31: #{tpu_custom_call.1} parent=1 // pred_check_branch
      %395 = sbr.rel (0) target = $region33
    $region32: #{tpu_custom_call.1} parent=1 // pred_region
      %397 = dma.done [#allocation6], 32
    $region33: #{tpu_custom_call.1} parent=1 // pred_fallthru
      _
    %398 = vsyncpa [#allocation5], 1
    %399 = vsyncpa [#allocation6], 1

</llo_original>
